<compile_context>
chip_gen: v6e
topology: v6e:2x2x1
jax: 0.10.0
libtpu: 0.0.40
codegen_flags: <defaults>
</compile_context>

<pallas_src>
import math

import jax
import jax.numpy as jnp
from jax.experimental import pallas as pl
from jax.experimental.pallas import tpu as pltpu


# ----------------------------- conv 3x3 + folded BN + ReLU ----------------------------- #

def conv3x3_bn_relu(x, w, scale, shift, *, tile_h=8):
    """3x3 conv (stride 1, zero pad 1) + folded BN affine + ReLU.

    x:     (N, H, W, Cin)    float32  (NHWC)
    w:     (3, 3, Cin, Cout) float32  (HWIO)
    scale: (Cout,)  = gamma / sqrt(running_var + eps)
    shift: (Cout,)  = beta + (conv_bias - running_mean) * scale
    returns (N, H, W, Cout) float32
    """
    N, H, W, Cin = x.shape
    Cout = w.shape[-1]
    TH = min(tile_h, H)
    assert H % TH == 0, "demo kernel assumes H % tile_h == 0"
    n_tiles = H // TH

    # Weights laid out per kernel row: (3, 3*Cin, Cout), bf16 for the MXU.
    wf = jnp.reshape(w, (3, 3 * Cin, Cout)).astype(jnp.bfloat16)
    s2 = scale.reshape(1, Cout).astype(jnp.float32)
    b2 = shift.reshape(1, Cout).astype(jnp.float32)

    def kernel(x_ref, w_ref, s_ref, b_ref, o_ref, slab_ref):
        t = pl.program_id(1)
        last = pl.num_programs(1) - 1
        row0 = pl.multiple_of(t * TH, TH)

        # Build the zero-padded (TH+2, W+2, Cin) bf16 input slab in VMEM.
        # Conv2d padding=1 is realized here: border halo rows/cols stay zero.
        slab_ref[...] = jnp.zeros((TH + 2, W + 2, Cin), jnp.bfloat16)
        slab_ref[1:TH + 1, 1:W + 1, :] = x_ref[pl.ds(row0, TH)].astype(jnp.bfloat16)

        @pl.when(t > 0)
        def _():
            slab_ref[0:1, 1:W + 1, :] = x_ref[pl.ds(row0 - 1, 1)].astype(jnp.bfloat16)

        @pl.when(t < last)
        def _():
            slab_ref[TH + 1:TH + 2, 1:W + 1, :] = (
                x_ref[pl.ds(row0 + TH, 1)].astype(jnp.bfloat16))

        # One MXU matmul per kernel row: (TH*W, 3*Cin) x (3*Cin, Cout), f32 acc.
        acc = jnp.zeros((TH * W, Cout), jnp.float32)
        for dy in range(3):
            slab = jnp.concatenate(
                [slab_ref[dy:dy + TH, 0:W, :],
                 slab_ref[dy:dy + TH, 1:W + 1, :],
                 slab_ref[dy:dy + TH, 2:W + 2, :]], axis=-1)      # (TH, W, 3*Cin)
            acc = acc + jnp.dot(slab.reshape(TH * W, 3 * Cin), w_ref[dy],
                                preferred_element_type=jnp.float32)

        y = jnp.maximum(acc * s_ref[...] + b_ref[...], 0.0)       # folded BN + ReLU
        o_ref[...] = y.reshape(TH, W, Cout).astype(o_ref.dtype)

    return pl.pallas_call(
        kernel,
        out_shape=jax.ShapeDtypeStruct((N, H, W, Cout), jnp.float32),
        grid=(N, n_tiles),
        in_specs=[
            pl.BlockSpec((None, H, W, Cin), lambda n, t: (n, 0, 0, 0)),
            pl.BlockSpec((3, 3 * Cin, Cout), lambda n, t: (0, 0, 0)),
            pl.BlockSpec((1, Cout), lambda n, t: (0, 0)),
            pl.BlockSpec((1, Cout), lambda n, t: (0, 0)),
        ],
        out_specs=pl.BlockSpec((None, TH, W, Cout), lambda n, t: (n, t, 0, 0)),
        scratch_shapes=[pltpu.VMEM((TH + 2, W + 2, Cin), jnp.bfloat16)],
        compiler_params=pltpu.CompilerParams(
            dimension_semantics=("parallel", "parallel")),
    )(x, wf, s2, b2)


# ----------------------------- ConvTranspose2d(k=2, stride=2) ----------------------------- #

def conv_transpose2x2(x1, w_flat, b_flat, *, tile_h=8):
    """ConvTranspose2d(C, C//2, kernel_size=2, stride=2) + bias as one GEMM.

    x1:     (N, H1, W1, C) float32 (NHWC)
    w_flat: (C, 4*(C//2))  tap-major layout [dy, dx, cout]
    b_flat: (1, 4*(C//2))  bias tiled over the 4 taps
    returns (N, 2*H1, 2*W1, C//2) float32
    """
    N, H1, W1, C = x1.shape
    K4 = w_flat.shape[-1]
    Ch = K4 // 4
    TH = min(tile_h, H1)
    assert H1 % TH == 0
    wf = w_flat.astype(jnp.bfloat16)
    bf = b_flat.astype(jnp.float32)

    def kernel(x_ref, w_ref, b_ref, o_ref):
        xf = x_ref[...].reshape(TH * W1, C).astype(jnp.bfloat16)
        y = jnp.dot(xf, w_ref[...], preferred_element_type=jnp.float32) + b_ref[...]
        o_ref[...] = y.reshape(TH, W1, K4).astype(o_ref.dtype)

    y4 = pl.pallas_call(
        kernel,
        out_shape=jax.ShapeDtypeStruct((N, H1, W1, K4), jnp.float32),
        grid=(N, H1 // TH),
        in_specs=[
            pl.BlockSpec((None, TH, W1, C), lambda n, t: (n, t, 0, 0)),
            pl.BlockSpec((C, K4), lambda n, t: (0, 0)),
            pl.BlockSpec((1, K4), lambda n, t: (0, 0)),
        ],
        out_specs=pl.BlockSpec((None, TH, W1, K4), lambda n, t: (n, t, 0, 0)),
        compiler_params=pltpu.CompilerParams(
            dimension_semantics=("parallel", "parallel")),
    )(x1, wf, bf)

    # Scatter the 4 transposed-conv taps to their (2h+dy, 2w+dx) positions (glue).
    up4 = y4.reshape(N, H1, W1, 2, 2, Ch)
    return jnp.transpose(up4, (0, 1, 3, 2, 4, 5)).reshape(N, 2 * H1, 2 * W1, Ch)


# ------------------------- parameter init (deterministic, synthetic) ------------------------- #

def _init_conv_bn(key, cin, cout):
    kw, kb, kg, kbeta, km, kv = jax.random.split(key, 6)
    fan_in = cin * 9
    bound = 1.0 / math.sqrt(fan_in)
    w = jax.random.uniform(kw, (3, 3, cin, cout), jnp.float32, -bound, bound)  # HWIO
    conv_b = jax.random.uniform(kb, (cout,), jnp.float32, -bound, bound)
    gamma = 1.0 + 0.1 * jax.random.normal(kg, (cout,), jnp.float32)
    beta = 0.1 * jax.random.normal(kbeta, (cout,), jnp.float32)
    r_mean = 0.05 * jax.random.normal(km, (cout,), jnp.float32)
    r_var = 1.0 + 0.1 * jax.random.uniform(kv, (cout,), jnp.float32)
    eps = 1e-5
    scale = gamma / jnp.sqrt(r_var + eps)
    shift = beta + (conv_b - r_mean) * scale          # conv bias folded into BN shift
    return {"w": w, "scale": scale, "shift": shift}


def _init_up_conv(key, cin):
    # ConvTranspose2d(cin, cin//2, 2, stride=2).  Weights generated directly in
    # (kh, kw, cin, cout) layout; a torch checkpoint (cin, cout, kh, kw) would map
    # via transpose(2, 3, 0, 1).
    ch = cin // 2
    kw, kb = jax.random.split(key)
    bound = 1.0 / math.sqrt(4 * ch)
    w_hwio = jax.random.uniform(kw, (2, 2, cin, ch), jnp.float32, -bound, bound)
    bias = jax.random.uniform(kb, (ch,), jnp.float32, -bound, bound)
    w_flat = jnp.transpose(w_hwio, (2, 0, 1, 3)).reshape(cin, 4 * ch)   # [dy,dx,co]
    b_flat = jnp.tile(bias, 4).reshape(1, 4 * ch)
    return {"w_hwio": w_hwio, "bias": bias, "w_flat": w_flat, "b_flat": b_flat}


def init_up(key, in_ch, out_ch):
    k0, k1, k2 = jax.random.split(key, 3)
    return {
        "up": _init_up_conv(k0, in_ch),
        "conv": {"c1": _init_conv_bn(k1, in_ch, out_ch),
                 "c2": _init_conv_bn(k2, out_ch, out_ch)},
    }


# ------------------------------------ forward (module) ------------------------------------ #

def double_conv_fwd(x, p):
    y = conv3x3_bn_relu(x, p["c1"]["w"], p["c1"]["scale"], p["c1"]["shift"])
    y = conv3x3_bn_relu(y, p["c2"]["w"], p["c2"]["scale"], p["c2"]["shift"])
    return y


def up_fwd(params, x1_nchw, x2_nchw):
    """Matches up.forward(x1, x2); NCHW in / NCHW out."""
    x1 = jnp.transpose(x1_nchw, (0, 2, 3, 1))           # NCHW -> NHWC
    x2 = jnp.transpose(x2_nchw, (0, 2, 3, 1))
    N, H1, W1, C1 = x1.shape
    assert x2.shape == (N, 2 * H1, 2 * W1, C1 // 2)
    upx = conv_transpose2x2(x1, params["up"]["w_flat"], params["up"]["b_flat"])
    x = jnp.concatenate([x2, upx], axis=-1)              # torch.cat([x2, x1], dim=1)
    y = double_conv_fwd(x, params["conv"])
    return jnp.transpose(y, (0, 3, 1, 2))                # NHWC -> NCHW


# --------------------------------- pure-JAX reference --------------------------------- #

def _conv3x3_bn_relu_ref(x, w, scale, shift):
    y = jax.lax.conv_general_dilated(
        x, w, window_strides=(1, 1), padding=((1, 1), (1, 1)),
        dimension_numbers=("NHWC", "HWIO", "NHWC"),
        precision=jax.lax.Precision.HIGHEST)
    return jnp.maximum(y * scale + shift, 0.0)


def up_fwd_ref(params, x1_nchw, x2_nchw):
    x1 = jnp.transpose(x1_nchw, (0, 2, 3, 1))
    x2 = jnp.transpose(x2_nchw, (0, 2, 3, 1))
    N, H1, W1, C1 = x1.shape
    ch = C1 // 2
    taps = jnp.einsum("nhwi,yxio->nhywxo", x1, params["up"]["w_hwio"],
                      precision=jax.lax.Precision.HIGHEST)      # (N,H1,2,W1,2,ch)
    up = taps.reshape(N, 2 * H1, 2 * W1, ch) + params["up"]["bias"]
    x = jnp.concatenate([x2, up], axis=-1)
    p = params["conv"]
    y = _conv3x3_bn_relu_ref(x, p["c1"]["w"], p["c1"]["scale"], p["c1"]["shift"])
    y = _conv3x3_bn_relu_ref(y, p["c2"]["w"], p["c2"]["scale"], p["c2"]["shift"])
    return jnp.transpose(y, (0, 3, 1, 2))


if __name__ == "__main__":
    key = jax.random.PRNGKey(0)
    kp, k1, k2 = jax.random.split(key, 3)
    in_ch, out_ch = 256, 128          # lane-dense UNet decoder stage: up(256, 128)
    N, H1, W1 = 2, 8, 8
    params = init_up(kp, in_ch, out_ch)
    x1 = jax.random.normal(k1, (N, in_ch, H1, W1), jnp.float32)              # NCHW
    x2 = jax.random.normal(k2, (N, in_ch // 2, 2 * H1, 2 * W1), jnp.float32)  # NCHW

    y = up_fwd(params, x1, x2)
    jax.block_until_ready(y)

    assert y.shape == (N, out_ch, 2 * H1, 2 * W1), y.shape
    assert y.dtype == jnp.float32

    # Loose-tolerance check vs a pure-JAX f32 reference (kernel uses bf16 MXU inputs).
    y_ref = up_fwd_ref(params, x1, x2)
    err = float(jnp.max(jnp.abs(y - y_ref)))
    assert err < 5e-2, f"max abs err vs reference too large: {err}"

    print("KERNEL_OK")
</pallas_src>

<mosaic_0001>
module attributes {stable_mosaic.version = 11 : i64} {
  func.func @kernel(%arg0: i32, %arg1: i32, %arg2: memref<1x8x8x256xf32, #tpu.memory_space<vmem>>, %arg3: memref<256x512xbf16, #tpu.memory_space<vmem>>, %arg4: memref<1x512xf32, #tpu.memory_space<vmem>>, %arg5: memref<1x8x8x512xf32, #tpu.memory_space<vmem>>) attributes {dimension_semantics = [#tpu.dimension_semantics<parallel>, #tpu.dimension_semantics<parallel>], iteration_bounds = array<i64: 2, 1>, scalar_prefetch = 0 : i64, scratch_operands = 0 : i64, tpu.core_type = #tpu.core_type<tc>, window_params = [{transform_indices = @transform_0, window_bounds = array<i64: 1, 8, 8, 256>}, {pipeline_mode = #tpu.pipeline_mode<synchronous>, transform_indices = @transform_1, window_bounds = array<i64: 256, 512>}, {pipeline_mode = #tpu.pipeline_mode<synchronous>, transform_indices = @transform_2, window_bounds = array<i64: 1, 512>}, {transform_indices = @transform_3, window_bounds = array<i64: 1, 8, 8, 512>}]} {
    %c0 = arith.constant 0 : index
    %c0_0 = arith.constant 0 : index
    %c0_1 = arith.constant 0 : index
    %c0_2 = arith.constant 0 : index
    %0 = vector.load %arg2[%c0, %c0_0, %c0_1, %c0_2] : memref<1x8x8x256xf32, #tpu.memory_space<vmem>>, vector<1x8x8x256xf32>
    %1 = vector.shape_cast %0 : vector<1x8x8x256xf32> to vector<8x8x256xf32>
    %2 = vector.shape_cast %1 : vector<8x8x256xf32> to vector<64x256xf32>
    %3 = arith.truncf %2 : vector<64x256xf32> to vector<64x256xbf16>
    %c0_3 = arith.constant 0 : index
    %c0_4 = arith.constant 0 : index
    %4 = vector.load %arg3[%c0_3, %c0_4] : memref<256x512xbf16, #tpu.memory_space<vmem>>, vector<256x512xbf16>
    %cst = arith.constant dense<0.000000e+00> : vector<64x512xf32>
    %5 = tpu.matmul %3, %4, %cst {dimension_numbers = #tpu.dot_dimension_numbers<[1], [0], [0], [1], [0, 0, 1, 1], [], []>} : vector<64x256xbf16>, vector<256x512xbf16>, vector<64x512xf32> -> vector<64x512xf32>
    %c0_5 = arith.constant 0 : index
    %c0_6 = arith.constant 0 : index
    %6 = vector.load %arg4[%c0_5, %c0_6] : memref<1x512xf32, #tpu.memory_space<vmem>>, vector<1x512xf32>
    %7 = vector.broadcast %6 : vector<1x512xf32> to vector<64x512xf32>
    %8 = arith.addf %5, %7 : vector<64x512xf32>
    %9 = vector.shape_cast %8 : vector<64x512xf32> to vector<8x8x512xf32>
    %c0_7 = arith.constant 0 : index
    %c0_8 = arith.constant 0 : index
    %c0_9 = arith.constant 0 : index
    %c0_10 = arith.constant 0 : index
    %10 = vector.load %arg5[%c0_7, %c0_8, %c0_9, %c0_10] : memref<1x8x8x512xf32, #tpu.memory_space<vmem>>, vector<1x8x8x512xf32>
    %11 = vector.shape_cast %10 : vector<1x8x8x512xf32> to vector<8x8x512xf32>
    %12 = vector.shape_cast %9 : vector<8x8x512xf32> to vector<1x8x8x512xf32>
    tpu.vector_store %arg5[%c0_7, %c0_8, %c0_9, %c0_10], %12 {strides = array<i32>} : memref<1x8x8x512xf32, #tpu.memory_space<vmem>>, vector<1x8x8x512xf32>,
    return
  }
  func.func @transform_0(%arg0: i32, %arg1: i32) -> (i32, i32, i32, i32) {
    %c0_i32 = arith.constant 0 : i32
    %c0_i32_0 = arith.constant 0 : i32
    %c0_i32_1 = arith.constant 0 : i32
    return %arg0, %arg1, %c0_i32, %c0_i32_0 : i32, i32, i32, i32
  }
  func.func @transform_1(%arg0: i32, %arg1: i32) -> (i32, i32) {
    %c0_i32 = arith.constant 0 : i32
    %c0_i32_0 = arith.constant 0 : i32
    %c0_i32_1 = arith.constant 0 : i32
    return %c0_i32, %c0_i32_0 : i32, i32
  }
  func.func @transform_2(%arg0: i32, %arg1: i32) -> (i32, i32) {
    %c0_i32 = arith.constant 0 : i32
    %c0_i32_0 = arith.constant 0 : i32
    %c0_i32_1 = arith.constant 0 : i32
    return %c0_i32, %c0_i32_0 : i32, i32
  }
  func.func @transform_3(%arg0: i32, %arg1: i32) -> (i32, i32, i32, i32) {
    %c0_i32 = arith.constant 0 : i32
    %c0_i32_0 = arith.constant 0 : i32
    %c0_i32_1 = arith.constant 0 : i32
    return %arg0, %arg1, %c0_i32, %c0_i32_0 : i32, i32, i32, i32
  }
}

</mosaic_0001>

<llo_original>
// kernel: tpu_custom_call.1
$region0: #{tpu_custom_call.1}
  #allocation0 [shape = 'u32[]', space=smem, size = 0x4, offset = 0x4, fixed_abs, tag = 'smem constant byte address 0x4 - core index']
  #allocation1 [shape = 'u32[144,128]{1,0:T(1,128)}', space=vmem, size = 0x12000, scoped, tag = 'internal scratch']
  %s0 = inlined_call_operand.hbm [shape: f32[2,8,8,256], index: 0, kind: input, shape index: {}]
  %s1 = inlined_call_operand.hbm [shape: bf16[256,512], index: 1, kind: input, shape index: {}]
  %s2 = inlined_call_operand.hbm [shape: f32[1,512], index: 2, kind: input, shape index: {}]
  %s3 = inlined_call_operand.hbm [shape: f32[2,8,8,512], index: 3, kind: output, shape index: {}]
  %s4 = sld [smem:[#allocation0]]
  $region57: #{tpu_custom_call.1} parent=0
    _
  %s6 = ssub.s32 1, %s4
  %s7 = scalar_select 0, %s6, %s4
  $region1: #{tpu_custom_call.1} parent=0
    #allocation2 [shape = 'u8[131072]{0}', space=vmem, size = 0x20000, scoped, tag = 'input window, operand 0']
    #allocation3 [shape = 's32[2]{0}', space=sflag, size = 0x8, scoped, tag = 'scoped memory for tpu_custom_call.1']
    #allocation4 [shape = 's32[2]{0}', space=sflag, size = 0x8, scoped, tag = 'scoped memory for tpu_custom_call.1']
    #allocation5 [shape = 'u8[262144]{0}', space=vmem, size = 0x40000, scoped, tag = 'input window, operand 1, single buffered']
    #allocation6 [shape = 's32[1]{0}', space=sflag, size = 0x4, scoped, tag = 'scoped memory for tpu_custom_call.1']
    #allocation7 [shape = 'u8[2048]{0}', space=vmem, size = 0x800, scoped, tag = 'input window, operand 2, single buffered']
    #allocation8 [shape = 'u8[262144]{0}', space=vmem, size = 0x40000, scoped, tag = 'output window, operand 0']
    %8 = vsyncpa [#allocation3], 0
    %s9 = scalar_lea.sflag [#allocation3], 1
    %10 = vsyncpa %s9, 0
    %11 = vsyncpa [#allocation6], 0
    %12 = vsyncpa [#allocation4], 0
    %s13 = scalar_lea.sflag [#allocation4], 1
    %14 = vsyncpa %s13, 0
    loop: start=0, step=1, limit=4
    $region2: #{tpu_custom_call.1} parent=1 // loop_pre_header
      _
    $region3: #{tpu_custom_call.1} parent=1 // loop_header
      %s16 = sphi 0, %s20
      %p17 = scmp.ge.s32.totalorder %s16, 4
      %s23 = sphi 0, %s35
      %s24 = sphi 0, %s31
      %s25 = sphi 0, %s23
      %s26 = sphi 0, %s24
      %s27 = sphi 0, %s25
      %s28 = sphi 0, %s26
      %s40 = sphi 0, %s42
      %s43 = sphi 0, %s40
      %s44 = sphi 0, %s43
      %s60 = sphi 0, %s44
      %s64 = sphi 0, %s64
      %s66 = sphi 0, %s64
      %s67 = sphi 0, %s66
      %s81 = sphi 0, %s67
      %s85 = sphi 0, %s85
      %s87 = sphi 0, %s85
      %s88 = sphi 0, %s87
      %s102 = sphi 0, %s88
      %s110 = sphi 0, %s112
      %s113 = sphi 0, %s110
      %s114 = sphi 0, %s113
      %s130 = sphi 0, %s114
    $region4: #{tpu_custom_call.1} parent=1 // loop_header_branch
      %19 = sbr.rel (%p17) target = $region8
    $region5: #{tpu_custom_call.1} parent=1 // loop_body
      %s21 = ssub.s32 %s16, 1
      %s22 = ssub.s32 %s16, 2
      %s29 = sadd.s32 1, %s24
      %p30 = scmp.ge.s32.totalorder %s29, 1
      %s31 = scalar_select %p30, 0, %s29
      %s32 = sadd.s32 1, %s23
      %s33 = scalar_select %p30, %s32, %s23
      %p34 = scmp.ge.s32.totalorder %s33, 2
      %s35 = scalar_select %p34, 0, %s33
      %s36 = ssub.s32 %s23, %s35
      %s37 = ssub.s32 %s24, %s31
      %s38 = sor.u32 %s36, %s37
      %p39 = scmp.eq.s32.totalorder %s38, 0
      %s41 = sadd.s32 %s40, 1
      %s42 = scalar_select %p39, %s40, %s41
      %p45 = pneg %p39
      %p46 = scmp.eq.s32.totalorder %s16, 1
      %p47 = por %p45, %p46
      %p48 = scmp.ne.s32.totalorder %s40, %s43
      %p49 = scmp.eq.s32.totalorder %s16, 0
      %p50 = por %p48, %p49
      %p51 = scmp.ne.s32.totalorder %s40, %s43
      %p52 = scmp.eq.s32.totalorder %s21, 1
      %p53 = por %p51, %p52
      %p54 = scmp.ne.s32.totalorder %s43, %s44
      %p55 = scmp.eq.s32.totalorder %s21, 0
      %p56 = por %p54, %p55
      %p57 = scmp.ne.s32.totalorder %s43, %s44
      %p58 = scmp.eq.s32.totalorder %s22, 1
      %p59 = por %p57, %p58
      %p61 = scmp.ne.s32.totalorder %s44, %s60
      %p62 = scmp.eq.s32.totalorder %s22, 0
      %p63 = por %p61, %p62
      %s65 = sadd.s32 %s64, 1
      %p68 = scmp.eq.s32.totalorder %s16, 1
      %p69 = scmp.ne.s32.totalorder %s64, %s66
      %p70 = scmp.eq.s32.totalorder %s16, 0
      %p71 = por %p69, %p70
      %p72 = scmp.ne.s32.totalorder %s64, %s66
      %p73 = scmp.eq.s32.totalorder %s21, 1
      %p74 = por %p72, %p73
      %p75 = scmp.ne.s32.totalorder %s66, %s67
      %p76 = scmp.eq.s32.totalorder %s21, 0
      %p77 = por %p75, %p76
      %p78 = scmp.ne.s32.totalorder %s66, %s67
      %p79 = scmp.eq.s32.totalorder %s22, 1
      %p80 = por %p78, %p79
      %p82 = scmp.ne.s32.totalorder %s67, %s81
      %p83 = scmp.eq.s32.totalorder %s22, 0
      %p84 = por %p82, %p83
      %s86 = sadd.s32 %s85, 1
      %p89 = scmp.eq.s32.totalorder %s16, 1
      %p90 = scmp.ne.s32.totalorder %s85, %s87
      %p91 = scmp.eq.s32.totalorder %s16, 0
      %p92 = por %p90, %p91
      %p93 = scmp.ne.s32.totalorder %s85, %s87
      %p94 = scmp.eq.s32.totalorder %s21, 1
      %p95 = por %p93, %p94
      %p96 = scmp.ne.s32.totalorder %s87, %s88
      %p97 = scmp.eq.s32.totalorder %s21, 0
      %p98 = por %p96, %p97
      %p99 = scmp.ne.s32.totalorder %s87, %s88
      %p100 = scmp.eq.s32.totalorder %s22, 1
      %p101 = por %p99, %p100
      %p103 = scmp.ne.s32.totalorder %s88, %s102
      %p104 = scmp.eq.s32.totalorder %s22, 0
      %p105 = por %p103, %p104
      %s106 = ssub.s32 %s23, %s35
      %s107 = ssub.s32 %s24, %s31
      %s108 = sor.u32 %s106, %s107
      %p109 = scmp.eq.s32.totalorder %s108, 0
      %s111 = sadd.s32 %s110, 1
      %s112 = scalar_select %p109, %s110, %s111
      %p115 = pneg %p109
      %p116 = scmp.eq.s32.totalorder %s16, 1
      %p117 = por %p115, %p116
      %p118 = scmp.ne.s32.totalorder %s110, %s113
      %p119 = scmp.eq.s32.totalorder %s16, 0
      %p120 = por %p118, %p119
      %p121 = scmp.ne.s32.totalorder %s110, %s113
      %p122 = scmp.eq.s32.totalorder %s21, 1
      %p123 = por %p121, %p122
      %p124 = scmp.ne.s32.totalorder %s113, %s114
      %p125 = scmp.eq.s32.totalorder %s21, 0
      %p126 = por %p124, %p125
      %p127 = scmp.ne.s32.totalorder %s113, %s114
      %p128 = scmp.eq.s32.totalorder %s22, 1
      %p129 = por %p127, %p128
      %p131 = scmp.ne.s32.totalorder %s114, %s130
      %p132 = scmp.eq.s32.totalorder %s22, 0
      %p133 = por %p131, %p132
      %p134 = scmp.le.s32.totalorder 1, %s16
      %p135 = scmp.lt.s32.totalorder %s16, 3
      %p136 = pnand %p134, %p135
      %p137 = pneg %p136
      // Predicated region
      $region9: #{tpu_custom_call.1} parent=5 // pred_check
        _
      $region10: #{tpu_custom_call.1} parent=5 // pred_check_branch
        %139 = sbr.rel (%p136) target = $region12
      $region11: #{tpu_custom_call.1} parent=5 // pred_region
        %s140 = ssub.s32 %s16, 1
        // Predicated region
        $region13: #{tpu_custom_call.1} parent=11 // pred_check
          %p141 = pneg %p77
        $region14: #{tpu_custom_call.1} parent=11 // pred_check_branch
          %143 = sbr.rel (%p141) target = $region16
        $region15: #{tpu_custom_call.1} parent=11 // pred_region
          %s145 = ssub.s32 8192, 8192
          %146 = vsyncadd [#allocation6], %s145
          %s147 = sshll.u32 [#allocation5], 4
          %s148 = int_to_ptr.vmem [resolvable:$true] %s147
          %153 = dma.hbm_to_vmem [thread:$0]  %s1, 8192, %s148, [#allocation6], 256, 256, 16
        $region16: #{tpu_custom_call.1} parent=11 // pred_fallthru
          _
        // Predicated region
        $region17: #{tpu_custom_call.1} parent=11 // pred_check
          %p154 = pneg %p98
        $region18: #{tpu_custom_call.1} parent=11 // pred_check_branch
          %156 = sbr.rel (%p154) target = $region20
        $region19: #{tpu_custom_call.1} parent=11 // pred_region
          %s158 = ssub.s32 64, 64
          %159 = vsyncadd [#allocation6], %s158
          %s161 = sshll.u32 [#allocation7], 4
          %s162 = int_to_ptr.vmem [resolvable:$true] %s161
          %164 = dma.hbm_to_vmem [thread:$0]  %s2, 64, %s162, [#allocation6]
        $region20: #{tpu_custom_call.1} parent=11 // pred_fallthru
          _
      $region12: #{tpu_custom_call.1} parent=5 // pred_fallthru
        _
      %p165 = scmp.lt.s32.totalorder %s16, 2
      // Predicated region
      $region21: #{tpu_custom_call.1} parent=5 // pred_check
        %p166 = pneg %p165
      $region22: #{tpu_custom_call.1} parent=5 // pred_check_branch
        %168 = sbr.rel (%p166) target = $region24
      $region23: #{tpu_custom_call.1} parent=5 // pred_region
        // Predicated region
        $region25: #{tpu_custom_call.1} parent=23 // pred_check
          %p169 = pneg %p50
        $region26: #{tpu_custom_call.1} parent=23 // pred_check_branch
          %171 = sbr.rel (%p169) target = $region28
        $region27: #{tpu_custom_call.1} parent=23 // pred_region
          %s172 = sand.u32 %s40, 1
          %s173 = scalar_lea.sflag [#allocation3], %s172
          %s174 = sand.u32 %s40, 1
          %s175 = smul.addr %s174, 128
          %s176 = scalar_lea.vmem [#allocation2], %s175
          %s177 = smul.u32 8, %s24
          %s179 = ssub.s32 2048, 2048
          %180 = vsyncadd %s173, %s179
          %s181 = smul.addr %s177, 2
          %s182 = smul.addr %s23, 16
          %s183 = sadd.s32 %s181, %s182
          %s184 = smul.addr %s183, 128
          %s185 = scalar_lea.hbm %s0, %s184
          %s186 = sshll.u32 %s176, 4
          %s187 = int_to_ptr.vmem [resolvable:$true] %s186
          %192 = dma.hbm_to_vmem [thread:$0]  %s185, 2048, %s187, %s173, 256, 256, 16
        $region28: #{tpu_custom_call.1} parent=23 // pred_fallthru
          _
      $region24: #{tpu_custom_call.1} parent=5 // pred_fallthru
        _
      %p193 = scmp.le.s32.totalorder 1, %s16
      %p194 = scmp.lt.s32.totalorder %s16, 3
      %p195 = pnand %p193, %p194
      %p196 = pneg %p195
      // Predicated region
      $region29: #{tpu_custom_call.1} parent=5 // pred_check
        _
      $region30: #{tpu_custom_call.1} parent=5 // pred_check_branch
        %198 = sbr.rel (%p195) target = $region32
      $region31: #{tpu_custom_call.1} parent=5 // pred_region
        %s199 = ssub.s32 %s16, 1
        %s200 = sand.u32 %s43, 1
        %s201 = scalar_lea.sflag [#allocation3], %s200
        %s202 = sand.u32 %s43, 1
        %s203 = smul.addr %s202, 128
        %s204 = scalar_lea.vmem [#allocation2], %s203
        // Predicated region
        $region33: #{tpu_custom_call.1} parent=31 // pred_check
          %p205 = pneg %p56
        $region34: #{tpu_custom_call.1} parent=31 // pred_check_branch
          %207 = sbr.rel (%p205) target = $region36
        $region35: #{tpu_custom_call.1} parent=31 // pred_region
          %208 = dma.done %s201, 2048
        $region36: #{tpu_custom_call.1} parent=31 // pred_fallthru
          _
        // Predicated region
        $region37: #{tpu_custom_call.1} parent=31 // pred_check
          %p209 = pneg %p77
        $region38: #{tpu_custom_call.1} parent=31 // pred_check_branch
          %211 = sbr.rel (%p209) target = $region40
        $region39: #{tpu_custom_call.1} parent=31 // pred_region
          %212 = dma.done [#allocation6], 8192
        $region40: #{tpu_custom_call.1} parent=31 // pred_fallthru
          _
        // Predicated region
        $region41: #{tpu_custom_call.1} parent=31 // pred_check
          %p213 = pneg %p98
        $region42: #{tpu_custom_call.1} parent=31 // pred_check_branch
          %215 = sbr.rel (%p213) target = $region44
        $region43: #{tpu_custom_call.1} parent=31 // pred_region
          %216 = dma.done [#allocation6], 64
        $region44: #{tpu_custom_call.1} parent=31 // pred_fallthru
          _
        %s217 = sand.u32 %s43, 1
        %s218 = scalar_lea.sflag [#allocation3], %s217
        %s219 = sand.u32 %s43, 1
        %s220 = smul.addr %s219, 128
        %s221 = scalar_lea.vmem [#allocation2], %s220
        %p222 = pneg %p56
        %p223 = pneg %p53
        %p224 = pneg %p77
        %p225 = pneg %p74
        %p226 = pneg %p98
        %p227 = pneg %p95
        %p228 = pneg %p126
        %p229 = pneg %p123
        %s230 = sand.u32 %s113, 1
        %s231 = scalar_lea.sflag [#allocation4], %s230
        %s232 = sand.u32 %s113, 1
        %s233 = smul.addr %s232, 256
        %s234 = scalar_lea.vmem [#allocation8], %s233
        %s235 = smul.u32 8, %s26
        %s236 = smul.u32 8, %s26
        %v237 = vld [vmem:[%s204] sm:$0xff]
        %v238 = vld [vmem:[%s204 + $0x8] sm:$0xff]
        %v239 = vld [vmem:[%s204 + $0x10] sm:$0xff]
        %v240 = vld [vmem:[%s204 + $0x18] sm:$0xff]
        %v241 = vld [vmem:[%s204 + $0x20] sm:$0xff]
        %v242 = vld [vmem:[%s204 + $0x28] sm:$0xff]
        %v243 = vld [vmem:[%s204 + $0x30] sm:$0xff]
        %v244 = vld [vmem:[%s204 + $0x38] sm:$0xff]
        %v245 = vld [vmem:[%s204 + $0x40] sm:$0xff]
        %v246 = vld [vmem:[%s204 + $0x48] sm:$0xff]
        %v247 = vld [vmem:[%s204 + $0x50] sm:$0xff]
        %v248 = vld [vmem:[%s204 + $0x58] sm:$0xff]
        %v249 = vld [vmem:[%s204 + $0x60] sm:$0xff]
        %v250 = vld [vmem:[%s204 + $0x68] sm:$0xff]
        %v251 = vld [vmem:[%s204 + $0x70] sm:$0xff]
        %v252 = vld [vmem:[%s204 + $0x78] sm:$0xff]
        %v253 = vpack.c.bf16 %v239, %v237
        %v254 = vpack.c.bf16 %v240, %v238
        %v255 = vpack.c.bf16 %v243, %v241
        %v256 = vpack.c.bf16 %v244, %v242
        %v257 = vpack.c.bf16 %v247, %v245
        %v258 = vpack.c.bf16 %v248, %v246
        %v259 = vpack.c.bf16 %v251, %v249
        %v260 = vpack.c.bf16 %v252, %v250
        %v261 = vld [vmem:[#allocation5] sm:$0xff]
        %v262 = vld [vmem:[#allocation5 + $0x8] sm:$0xff]
        %v263 = vld [vmem:[#allocation5 + $0x10] sm:$0xff]
        %v264 = vld [vmem:[#allocation5 + $0x18] sm:$0xff]
        %v265 = vld [vmem:[#allocation5 + $0x20] sm:$0xff]
        %v266 = vld [vmem:[#allocation5 + $0x28] sm:$0xff]
        %v267 = vld [vmem:[#allocation5 + $0x30] sm:$0xff]
        %v268 = vld [vmem:[#allocation5 + $0x38] sm:$0xff]
        %v269 = vld [vmem:[#allocation5 + $0x40] sm:$0xff]
        %v270 = vld [vmem:[#allocation5 + $0x48] sm:$0xff]
        %v271 = vld [vmem:[#allocation5 + $0x50] sm:$0xff]
        %v272 = vld [vmem:[#allocation5 + $0x58] sm:$0xff]
        %v273 = vld [vmem:[#allocation5 + $0x60] sm:$0xff]
        %v274 = vld [vmem:[#allocation5 + $0x68] sm:$0xff]
        %v275 = vld [vmem:[#allocation5 + $0x70] sm:$0xff]
        %v276 = vld [vmem:[#allocation5 + $0x78] sm:$0xff]
        %v277 = vld [vmem:[#allocation5 + $0x80] sm:$0xff]
        %v278 = vld [vmem:[#allocation5 + $0x88] sm:$0xff]
        %v279 = vld [vmem:[#allocation5 + $0x90] sm:$0xff]
        %v280 = vld [vmem:[#allocation5 + $0x98] sm:$0xff]
        %v281 = vld [vmem:[#allocation5 + $0xa0] sm:$0xff]
        %v282 = vld [vmem:[#allocation5 + $0xa8] sm:$0xff]
        %v283 = vld [vmem:[#allocation5 + $0xb0] sm:$0xff]
        %v284 = vld [vmem:[#allocation5 + $0xb8] sm:$0xff]
        %v285 = vld [vmem:[#allocation5 + $0xc0] sm:$0xff]
        %v286 = vld [vmem:[#allocation5 + $0xc8] sm:$0xff]
        %v287 = vld [vmem:[#allocation5 + $0xd0] sm:$0xff]
        %v288 = vld [vmem:[#allocation5 + $0xd8] sm:$0xff]
        %v289 = vld [vmem:[#allocation5 + $0xe0] sm:$0xff]
        %v290 = vld [vmem:[#allocation5 + $0xe8] sm:$0xff]
        %v291 = vld [vmem:[#allocation5 + $0xf0] sm:$0xff]
        %v292 = vld [vmem:[#allocation5 + $0xf8] sm:$0xff]
        %v293 = vld [vmem:[#allocation5 + $0x100] sm:$0xff]
        %v294 = vld [vmem:[#allocation5 + $0x108] sm:$0xff]
        %v295 = vld [vmem:[#allocation5 + $0x110] sm:$0xff]
        %v296 = vld [vmem:[#allocation5 + $0x118] sm:$0xff]
        %v297 = vld [vmem:[#allocation5 + $0x120] sm:$0xff]
        %v298 = vld [vmem:[#allocation5 + $0x128] sm:$0xff]
        %v299 = vld [vmem:[#allocation5 + $0x130] sm:$0xff]
        %v300 = vld [vmem:[#allocation5 + $0x138] sm:$0xff]
        %v301 = vld [vmem:[#allocation5 + $0x140] sm:$0xff]
        %v302 = vld [vmem:[#allocation5 + $0x148] sm:$0xff]
        %v303 = vld [vmem:[#allocation5 + $0x150] sm:$0xff]
        %v304 = vld [vmem:[#allocation5 + $0x158] sm:$0xff]
        %v305 = vld [vmem:[#allocation5 + $0x160] sm:$0xff]
        %v306 = vld [vmem:[#allocation5 + $0x168] sm:$0xff]
        %v307 = vld [vmem:[#allocation5 + $0x170] sm:$0xff]
        %v308 = vld [vmem:[#allocation5 + $0x178] sm:$0xff]
        %v309 = vld [vmem:[#allocation5 + $0x180] sm:$0xff]
        %v310 = vld [vmem:[#allocation5 + $0x188] sm:$0xff]
        %v311 = vld [vmem:[#allocation5 + $0x190] sm:$0xff]
        %v312 = vld [vmem:[#allocation5 + $0x198] sm:$0xff]
        %v313 = vld [vmem:[#allocation5 + $0x1a0] sm:$0xff]
        %v314 = vld [vmem:[#allocation5 + $0x1a8] sm:$0xff]
        %v315 = vld [vmem:[#allocation5 + $0x1b0] sm:$0xff]
        %v316 = vld [vmem:[#allocation5 + $0x1b8] sm:$0xff]
        %v317 = vld [vmem:[#allocation5 + $0x1c0] sm:$0xff]
        %v318 = vld [vmem:[#allocation5 + $0x1c8] sm:$0xff]
        %v319 = vld [vmem:[#allocation5 + $0x1d0] sm:$0xff]
        %v320 = vld [vmem:[#allocation5 + $0x1d8] sm:$0xff]
        %v321 = vld [vmem:[#allocation5 + $0x1e0] sm:$0xff]
        %v322 = vld [vmem:[#allocation5 + $0x1e8] sm:$0xff]
        %v323 = vld [vmem:[#allocation5 + $0x1f0] sm:$0xff]
        %v324 = vld [vmem:[#allocation5 + $0x1f8] sm:$0xff]
        %v325 = vld [vmem:[#allocation7] sm:$0xf]
        %v327 = vlaneseq
        %v328 = vshrl.u32 %v327, 7
        %v329 = vsub.s32 0, %v328
        %v330 = vrot.slane %v325, %v329
        %v331 = vlaneseq
        %v332 = vshrl.u32 %v331, 7
        %v333 = vsub.s32 1, %v332
        %v334 = vrot.slane %v325, %v333
        %v335 = vlaneseq
        %v336 = vshrl.u32 %v335, 7
        %v337 = vsub.s32 2, %v336
        %v338 = vrot.slane %v325, %v337
        %v339 = vlaneseq
        %v340 = vshrl.u32 %v339, 7
        %v341 = vsub.s32 3, %v340
        %v342 = vrot.slane %v325, %v341
        %v411 = vunpack.c.l.b16 %v261
        %v412 = vunpack.c.h.b16 %v261
        %v413 = vunpack.c.l.b16 %v262
        %v414 = vunpack.c.h.b16 %v262
        %v415 = vunpack.c.l.b16 %v263
        %v416 = vunpack.c.h.b16 %v263
        %v417 = vunpack.c.l.b16 %v264
        %v418 = vunpack.c.h.b16 %v264
        %v419 = vunpack.c.l.b16 %v265
        %v420 = vunpack.c.h.b16 %v265
        %v421 = vunpack.c.l.b16 %v266
        %v422 = vunpack.c.h.b16 %v266
        %v423 = vunpack.c.l.b16 %v267
        %v424 = vunpack.c.h.b16 %v267
        %v425 = vunpack.c.l.b16 %v268
        %v426 = vunpack.c.h.b16 %v268
        %v427 = vunpack.c.l.b16 %v269
        %v428 = vunpack.c.h.b16 %v269
        %v429 = vunpack.c.l.b16 %v270
        %v430 = vunpack.c.h.b16 %v270
        %v431 = vunpack.c.l.b16 %v271
        %v432 = vunpack.c.h.b16 %v271
        %v433 = vunpack.c.l.b16 %v272
        %v434 = vunpack.c.h.b16 %v272
        %v435 = vunpack.c.l.b16 %v273
        %v436 = vunpack.c.h.b16 %v273
        %v437 = vunpack.c.l.b16 %v274
        %v438 = vunpack.c.h.b16 %v274
        %v439 = vunpack.c.l.b16 %v275
        %v440 = vunpack.c.h.b16 %v275
        %v441 = vunpack.c.l.b16 %v276
        %v442 = vunpack.c.h.b16 %v276
        %v443 = vunpack.c.l.b16 %v277
        %v444 = vunpack.c.h.b16 %v277
        %v445 = vunpack.c.l.b16 %v278
        %v446 = vunpack.c.h.b16 %v278
        %v447 = vunpack.c.l.b16 %v279
        %v448 = vunpack.c.h.b16 %v279
        %v449 = vunpack.c.l.b16 %v280
        %v450 = vunpack.c.h.b16 %v280
        %v451 = vunpack.c.l.b16 %v281
        %v452 = vunpack.c.h.b16 %v281
        %v453 = vunpack.c.l.b16 %v282
        %v454 = vunpack.c.h.b16 %v282
        %v455 = vunpack.c.l.b16 %v283
        %v456 = vunpack.c.h.b16 %v283
        %v457 = vunpack.c.l.b16 %v284
        %v458 = vunpack.c.h.b16 %v284
        %v459 = vunpack.c.l.b16 %v285
        %v460 = vunpack.c.h.b16 %v285
        %v461 = vunpack.c.l.b16 %v286
        %v462 = vunpack.c.h.b16 %v286
        %v463 = vunpack.c.l.b16 %v287
        %v464 = vunpack.c.h.b16 %v287
        %v465 = vunpack.c.l.b16 %v288
        %v466 = vunpack.c.h.b16 %v288
        %v467 = vunpack.c.l.b16 %v289
        %v468 = vunpack.c.h.b16 %v289
        %v469 = vunpack.c.l.b16 %v290
        %v470 = vunpack.c.h.b16 %v290
        %v471 = vunpack.c.l.b16 %v291
        %v472 = vunpack.c.h.b16 %v291
        %v473 = vunpack.c.l.b16 %v292
        %v474 = vunpack.c.h.b16 %v292
        %v475 = vunpack.c.l.b16 %v293
        %v476 = vunpack.c.h.b16 %v293
        %v477 = vunpack.c.l.b16 %v294
        %v478 = vunpack.c.h.b16 %v294
        %v479 = vunpack.c.l.b16 %v295
        %v480 = vunpack.c.h.b16 %v295
        %v481 = vunpack.c.l.b16 %v296
        %v482 = vunpack.c.h.b16 %v296
        %v483 = vunpack.c.l.b16 %v297
        %v484 = vunpack.c.h.b16 %v297
        %v485 = vunpack.c.l.b16 %v298
        %v486 = vunpack.c.h.b16 %v298
        %v487 = vunpack.c.l.b16 %v299
        %v488 = vunpack.c.h.b16 %v299
        %v489 = vunpack.c.l.b16 %v300
        %v490 = vunpack.c.h.b16 %v300
        %v491 = vunpack.c.l.b16 %v301
        %v492 = vunpack.c.h.b16 %v301
        %v493 = vunpack.c.l.b16 %v302
        %v494 = vunpack.c.h.b16 %v302
        %v495 = vunpack.c.l.b16 %v303
        %v496 = vunpack.c.h.b16 %v303
        %v497 = vunpack.c.l.b16 %v304
        %v498 = vunpack.c.h.b16 %v304
        %v499 = vunpack.c.l.b16 %v305
        %v500 = vunpack.c.h.b16 %v305
        %v501 = vunpack.c.l.b16 %v306
        %v502 = vunpack.c.h.b16 %v306
        %v503 = vunpack.c.l.b16 %v307
        %v504 = vunpack.c.h.b16 %v307
        %v505 = vunpack.c.l.b16 %v308
        %v506 = vunpack.c.h.b16 %v308
        %v507 = vunpack.c.l.b16 %v309
        %v508 = vunpack.c.h.b16 %v309
        %v509 = vunpack.c.l.b16 %v310
        %v510 = vunpack.c.h.b16 %v310
        %v511 = vunpack.c.l.b16 %v311
        %v512 = vunpack.c.h.b16 %v311
        %v513 = vunpack.c.l.b16 %v312
        %v514 = vunpack.c.h.b16 %v312
        %v515 = vunpack.c.l.b16 %v313
        %v516 = vunpack.c.h.b16 %v313
        %v517 = vunpack.c.l.b16 %v314
        %v518 = vunpack.c.h.b16 %v314
        %v519 = vunpack.c.l.b16 %v315
        %v520 = vunpack.c.h.b16 %v315
        %v521 = vunpack.c.l.b16 %v316
        %v522 = vunpack.c.h.b16 %v316
        %v523 = vunpack.c.l.b16 %v317
        %v524 = vunpack.c.h.b16 %v317
        %v525 = vunpack.c.l.b16 %v318
        %v526 = vunpack.c.h.b16 %v318
        %v527 = vunpack.c.l.b16 %v319
        %v528 = vunpack.c.h.b16 %v319
        %v529 = vunpack.c.l.b16 %v320
        %v530 = vunpack.c.h.b16 %v320
        %v531 = vunpack.c.l.b16 %v321
        %v532 = vunpack.c.h.b16 %v321
        %v533 = vunpack.c.l.b16 %v322
        %v534 = vunpack.c.h.b16 %v322
        %v535 = vunpack.c.l.b16 %v323
        %v536 = vunpack.c.h.b16 %v323
        %v537 = vunpack.c.l.b16 %v324
        %v538 = vunpack.c.h.b16 %v324
        %v539 = vpack.c.b16 %v415, %v411
        %v540 = vpack.c.b16 %v416, %v412
        %v541 = vpack.c.b16 %v417, %v413
        %v542 = vpack.c.b16 %v418, %v414
        %v543 = vpack.c.b16 %v423, %v419
        %v544 = vpack.c.b16 %v424, %v420
        %v545 = vpack.c.b16 %v425, %v421
        %v546 = vpack.c.b16 %v426, %v422
        %v547 = vpack.c.b16 %v431, %v427
        %v548 = vpack.c.b16 %v432, %v428
        %v549 = vpack.c.b16 %v433, %v429
        %v550 = vpack.c.b16 %v434, %v430
        %v551 = vpack.c.b16 %v439, %v435
        %v552 = vpack.c.b16 %v440, %v436
        %v553 = vpack.c.b16 %v441, %v437
        %v554 = vpack.c.b16 %v442, %v438
        %v555 = vpack.c.b16 %v447, %v443
        %v556 = vpack.c.b16 %v448, %v444
        %v557 = vpack.c.b16 %v449, %v445
        %v558 = vpack.c.b16 %v450, %v446
        %v559 = vpack.c.b16 %v455, %v451
        %v560 = vpack.c.b16 %v456, %v452
        %v561 = vpack.c.b16 %v457, %v453
        %v562 = vpack.c.b16 %v458, %v454
        %v563 = vpack.c.b16 %v463, %v459
        %v564 = vpack.c.b16 %v464, %v460
        %v565 = vpack.c.b16 %v465, %v461
        %v566 = vpack.c.b16 %v466, %v462
        %v567 = vpack.c.b16 %v471, %v467
        %v568 = vpack.c.b16 %v472, %v468
        %v569 = vpack.c.b16 %v473, %v469
        %v570 = vpack.c.b16 %v474, %v470
        %v571 = vpack.c.b16 %v479, %v475
        %v572 = vpack.c.b16 %v480, %v476
        %v573 = vpack.c.b16 %v481, %v477
        %v574 = vpack.c.b16 %v482, %v478
        %v575 = vpack.c.b16 %v487, %v483
        %v576 = vpack.c.b16 %v488, %v484
        %v577 = vpack.c.b16 %v489, %v485
        %v578 = vpack.c.b16 %v490, %v486
        %v579 = vpack.c.b16 %v495, %v491
        %v580 = vpack.c.b16 %v496, %v492
        %v581 = vpack.c.b16 %v497, %v493
        %v582 = vpack.c.b16 %v498, %v494
        %v583 = vpack.c.b16 %v503, %v499
        %v584 = vpack.c.b16 %v504, %v500
        %v585 = vpack.c.b16 %v505, %v501
        %v586 = vpack.c.b16 %v506, %v502
        %v587 = vpack.c.b16 %v511, %v507
        %v588 = vpack.c.b16 %v512, %v508
        %v589 = vpack.c.b16 %v513, %v509
        %v590 = vpack.c.b16 %v514, %v510
        %v591 = vpack.c.b16 %v519, %v515
        %v592 = vpack.c.b16 %v520, %v516
        %v593 = vpack.c.b16 %v521, %v517
        %v594 = vpack.c.b16 %v522, %v518
        %v595 = vpack.c.b16 %v527, %v523
        %v596 = vpack.c.b16 %v528, %v524
        %v597 = vpack.c.b16 %v529, %v525
        %v598 = vpack.c.b16 %v530, %v526
        %v599 = vpack.c.b16 %v535, %v531
        %v600 = vpack.c.b16 %v536, %v532
        %v601 = vpack.c.b16 %v537, %v533
        %v602 = vpack.c.b16 %v538, %v534
        %667 = vmatprep.subr.bf16.mxu0 %v568
        %668 = vmatpush1.bf16.msra.mxu0 %v567
        %669 = vmatprep.subr.bf16.mxu0 %v564
        %670 = vmatpush1.bf16.msra.mxu0 %v563
        %671 = vmatprep.subr.bf16.mxu0 %v560
        %672 = vmatpush1.bf16.msra.mxu0 %v559
        %673 = vmatprep.subr.bf16.mxu0 %v556
        %674 = vmatpush1.bf16.msra.mxu0 %v555
        %675 = vmatprep.subr.bf16.mxu0 %v552
        %676 = vmatpush1.bf16.msra.mxu0 %v551
        %677 = vmatprep.subr.bf16.mxu0 %v548
        %678 = vmatpush1.bf16.msra.mxu0 %v547
        %679 = vmatprep.subr.bf16.mxu0 %v544
        %680 = vmatpush1.bf16.msra.mxu0 %v543
        %681 = vmatprep.subr.bf16.mxu0 %v540
        %682 = vmatpush1.bf16.msra.mxu0 %v539
        %683 = vmatprep.subr.bf16.mxu0 %v600
        %684 = vmatpush2.bf16.msra.mxu0 %v599
        %685 = vmatprep.subr.bf16.mxu0 %v596
        %686 = vmatpush2.bf16.msra.mxu0 %v595
        %687 = vmatprep.subr.bf16.mxu0 %v592
        %688 = vmatpush2.bf16.msra.mxu0 %v591
        %689 = vmatprep.subr.bf16.mxu0 %v588
        %690 = vmatpush2.bf16.msra.mxu0 %v587
        %691 = vmatprep.subr.bf16.mxu0 %v584
        %692 = vmatpush2.bf16.msra.mxu0 %v583
        %693 = vmatprep.subr.bf16.mxu0 %v580
        %694 = vmatpush2.bf16.msra.mxu0 %v579
        %695 = vmatprep.subr.bf16.mxu0 %v576
        %696 = vmatpush2.bf16.msra.mxu0 %v575
        %697 = vmatprep.subr.bf16.mxu0 %v572
        %698 = vmatpush2.bf16.msra.mxu0 %v571
        %699 = vmatprep.mubr.bf16.mxu0 %v254
        %700 = vmatmul.mubr.bf16.gmra.mxu0 %v253
        %v701 = vpop.f32.mrf.mxu0
        %v702 = vadd.f32 %v330, %v701
        %v703 = vpop.f32.mrf.mxu0
        %v704 = vadd.f32 %v334, %v703
        %v705 = vpop.f32.mrf.mxu0
        %v706 = vadd.f32 %v330, %v705
        %v707 = vpop.f32.mrf.mxu0
        %v708 = vadd.f32 %v334, %v707
        %709 = vmatprep.mubr.bf16.mxu0 %v256
        %710 = vmatmul.mubr.bf16.gmra.mxu0 %v255
        %v711 = vpop.f32.mrf.mxu0
        %v712 = vadd.f32 %v330, %v711
        %v713 = vpop.f32.mrf.mxu0
        %v714 = vadd.f32 %v334, %v713
        %v715 = vpop.f32.mrf.mxu0
        %v716 = vadd.f32 %v330, %v715
        %v717 = vpop.f32.mrf.mxu0
        %v718 = vadd.f32 %v334, %v717
        %719 = vmatprep.mubr.bf16.mxu0 %v258
        %720 = vmatmul.mubr.bf16.gmra.mxu0 %v257
        %v721 = vpop.f32.mrf.mxu0
        %v722 = vadd.f32 %v330, %v721
        %v723 = vpop.f32.mrf.mxu0
        %v724 = vadd.f32 %v334, %v723
        %v725 = vpop.f32.mrf.mxu0
        %v726 = vadd.f32 %v330, %v725
        %v727 = vpop.f32.mrf.mxu0
        %v728 = vadd.f32 %v334, %v727
        %729 = vmatprep.mubr.bf16.mxu0 %v260
        %730 = vmatmul.mubr.bf16.gmra.mxu0 %v259
        %v731 = vpop.f32.mrf.mxu0
        %v732 = vadd.f32 %v330, %v731
        %v733 = vpop.f32.mrf.mxu0
        %v734 = vadd.f32 %v334, %v733
        %v735 = vpop.f32.mrf.mxu0
        %v736 = vadd.f32 %v330, %v735
        %v737 = vpop.f32.mrf.mxu0
        %v738 = vadd.f32 %v334, %v737
        %739 = vdwg.mxu0
        %740 = vmatprep.subr.bf16.mxu0 %v570
        %741 = vmatpush1.bf16.msra.mxu0 %v569
        %742 = vmatprep.subr.bf16.mxu0 %v566
        %743 = vmatpush1.bf16.msra.mxu0 %v565
        %744 = vmatprep.subr.bf16.mxu0 %v562
        %745 = vmatpush1.bf16.msra.mxu0 %v561
        %746 = vmatprep.subr.bf16.mxu0 %v558
        %747 = vmatpush1.bf16.msra.mxu0 %v557
        %748 = vmatprep.subr.bf16.mxu0 %v554
        %749 = vmatpush1.bf16.msra.mxu0 %v553
        %750 = vmatprep.subr.bf16.mxu0 %v550
        %751 = vmatpush1.bf16.msra.mxu0 %v549
        %752 = vmatprep.subr.bf16.mxu0 %v546
        %753 = vmatpush1.bf16.msra.mxu0 %v545
        %754 = vmatprep.subr.bf16.mxu0 %v542
        %755 = vmatpush1.bf16.msra.mxu0 %v541
        %756 = vmatprep.subr.bf16.mxu0 %v602
        %757 = vmatpush2.bf16.msra.mxu0 %v601
        %758 = vmatprep.subr.bf16.mxu0 %v598
        %759 = vmatpush2.bf16.msra.mxu0 %v597
        %760 = vmatprep.subr.bf16.mxu0 %v594
        %761 = vmatpush2.bf16.msra.mxu0 %v593
        %762 = vmatprep.subr.bf16.mxu0 %v590
        %763 = vmatpush2.bf16.msra.mxu0 %v589
        %764 = vmatprep.subr.bf16.mxu0 %v586
        %765 = vmatpush2.bf16.msra.mxu0 %v585
        %766 = vmatprep.subr.bf16.mxu0 %v582
        %767 = vmatpush2.bf16.msra.mxu0 %v581
        %768 = vmatprep.subr.bf16.mxu0 %v578
        %769 = vmatpush2.bf16.msra.mxu0 %v577
        %770 = vmatprep.subr.bf16.mxu0 %v574
        %771 = vmatpush2.bf16.msra.mxu0 %v573
        %772 = vmatprep.mubr.bf16.mxu0 %v254
        %773 = vmatmul.mubr.bf16.gmra.mxu0 %v253
        %v774 = vpop.f32.mrf.mxu0
        %v775 = vadd.f32 %v338, %v774
        %v776 = vpop.f32.mrf.mxu0
        %v777 = vadd.f32 %v342, %v776
        %v778 = vpop.f32.mrf.mxu0
        %v779 = vadd.f32 %v338, %v778
        %v780 = vpop.f32.mrf.mxu0
        %v781 = vadd.f32 %v342, %v780
        %782 = vmatprep.mubr.bf16.mxu0 %v256
        %783 = vmatmul.mubr.bf16.gmra.mxu0 %v255
        %v784 = vpop.f32.mrf.mxu0
        %v785 = vadd.f32 %v338, %v784
        %v786 = vpop.f32.mrf.mxu0
        %v787 = vadd.f32 %v342, %v786
        %v788 = vpop.f32.mrf.mxu0
        %v789 = vadd.f32 %v338, %v788
        %v790 = vpop.f32.mrf.mxu0
        %v791 = vadd.f32 %v342, %v790
        %792 = vmatprep.mubr.bf16.mxu0 %v258
        %793 = vmatmul.mubr.bf16.gmra.mxu0 %v257
        %v794 = vpop.f32.mrf.mxu0
        %v795 = vadd.f32 %v338, %v794
        %v796 = vpop.f32.mrf.mxu0
        %v797 = vadd.f32 %v342, %v796
        %v798 = vpop.f32.mrf.mxu0
        %v799 = vadd.f32 %v338, %v798
        %v800 = vpop.f32.mrf.mxu0
        %v801 = vadd.f32 %v342, %v800
        %802 = vmatprep.mubr.bf16.mxu0 %v260
        %803 = vmatmul.mubr.bf16.gmra.mxu0 %v259
        %v804 = vpop.f32.mrf.mxu0
        %v805 = vadd.f32 %v338, %v804
        %v806 = vpop.f32.mrf.mxu0
        %v807 = vadd.f32 %v342, %v806
        %v808 = vpop.f32.mrf.mxu0
        %v809 = vadd.f32 %v338, %v808
        %v810 = vpop.f32.mrf.mxu0
        %v811 = vadd.f32 %v342, %v810
        %812 = vdwg.mxu0
        %813 = vst [vmem:[%s234] sm:$0xff] %v702
        %814 = vst [vmem:[%s234 + $0x8] sm:$0xff] %v704
        %815 = vst [vmem:[%s234 + $0x10] sm:$0xff] %v775
        %816 = vst [vmem:[%s234 + $0x18] sm:$0xff] %v777
        %817 = vst [vmem:[%s234 + $0x20] sm:$0xff] %v706
        %818 = vst [vmem:[%s234 + $0x28] sm:$0xff] %v708
        %819 = vst [vmem:[%s234 + $0x30] sm:$0xff] %v779
        %820 = vst [vmem:[%s234 + $0x38] sm:$0xff] %v781
        %821 = vst [vmem:[%s234 + $0x40] sm:$0xff] %v712
        %822 = vst [vmem:[%s234 + $0x48] sm:$0xff] %v714
        %823 = vst [vmem:[%s234 + $0x50] sm:$0xff] %v785
        %824 = vst [vmem:[%s234 + $0x58] sm:$0xff] %v787
        %825 = vst [vmem:[%s234 + $0x60] sm:$0xff] %v716
        %826 = vst [vmem:[%s234 + $0x68] sm:$0xff] %v718
        %827 = vst [vmem:[%s234 + $0x70] sm:$0xff] %v789
        %828 = vst [vmem:[%s234 + $0x78] sm:$0xff] %v791
        %829 = vst [vmem:[%s234 + $0x80] sm:$0xff] %v722
        %830 = vst [vmem:[%s234 + $0x88] sm:$0xff] %v724
        %831 = vst [vmem:[%s234 + $0x90] sm:$0xff] %v795
        %832 = vst [vmem:[%s234 + $0x98] sm:$0xff] %v797
        %833 = vst [vmem:[%s234 + $0xa0] sm:$0xff] %v726
        %834 = vst [vmem:[%s234 + $0xa8] sm:$0xff] %v728
        %835 = vst [vmem:[%s234 + $0xb0] sm:$0xff] %v799
        %836 = vst [vmem:[%s234 + $0xb8] sm:$0xff] %v801
        %837 = vst [vmem:[%s234 + $0xc0] sm:$0xff] %v732
        %838 = vst [vmem:[%s234 + $0xc8] sm:$0xff] %v734
        %839 = vst [vmem:[%s234 + $0xd0] sm:$0xff] %v805
        %840 = vst [vmem:[%s234 + $0xd8] sm:$0xff] %v807
        %841 = vst [vmem:[%s234 + $0xe0] sm:$0xff] %v736
        %842 = vst [vmem:[%s234 + $0xe8] sm:$0xff] %v738
        %843 = vst [vmem:[%s234 + $0xf0] sm:$0xff] %v809
        %844 = vst [vmem:[%s234 + $0xf8] sm:$0xff] %v811
        %s845 = sand.u32 %s113, 1
        %s846 = scalar_lea.sflag [#allocation4], %s845
        %s847 = sand.u32 %s113, 1
        %s848 = smul.addr %s847, 256
        %s849 = scalar_lea.vmem [#allocation8], %s848
        // Predicated region
        $region45: #{tpu_custom_call.1} parent=31 // pred_check
          %p850 = pneg %p123
        $region46: #{tpu_custom_call.1} parent=31 // pred_check_branch
          %852 = sbr.rel (%p850) target = $region48
        $region47: #{tpu_custom_call.1} parent=31 // pred_region
          %s853 = smul.u32 8, %s26
          %s855 = ssub.s32 4096, 4096
          %856 = vsyncadd %s846, %s855
          %s857 = smul.addr %s853, 4
          %s858 = smul.addr %s25, 32
          %s859 = sadd.s32 %s857, %s858
          %s860 = smul.addr %s859, 128
          %s861 = scalar_lea.hbm %s3, %s860
          %s862 = sshll.u32 %s849, 4
          %s863 = int_to_ptr.vmem [resolvable:$true] %s862
          %868 = dma.vmem_to_hbm [thread:$0]  %s863, 4096, %s861, %s846, 512, 512, 32
        $region48: #{tpu_custom_call.1} parent=31 // pred_fallthru
          _
      $region32: #{tpu_custom_call.1} parent=5 // pred_fallthru
        _
      %p869 = scmp.le.s32.totalorder 2, %s16
      // Predicated region
      $region49: #{tpu_custom_call.1} parent=5 // pred_check
        %p870 = pneg %p869
      $region50: #{tpu_custom_call.1} parent=5 // pred_check_branch
        %872 = sbr.rel (%p870) target = $region52
      $region51: #{tpu_custom_call.1} parent=5 // pred_region
        %s873 = ssub.s32 %s16, 2
        // Predicated region
        $region53: #{tpu_custom_call.1} parent=51 // pred_check
          %p874 = pneg %p129
        $region54: #{tpu_custom_call.1} parent=51 // pred_check_branch
          %876 = sbr.rel (%p874) target = $region56
        $region55: #{tpu_custom_call.1} parent=51 // pred_region
          %s877 = sand.u32 %s114, 1
          %s878 = scalar_lea.sflag [#allocation4], %s877
          %s879 = sand.u32 %s114, 1
          %s880 = smul.addr %s879, 256
          %s881 = scalar_lea.vmem [#allocation8], %s880
          %882 = dma.done %s878, 4096
        $region56: #{tpu_custom_call.1} parent=51 // pred_fallthru
          _
      $region52: #{tpu_custom_call.1} parent=5 // pred_fallthru
        _
    $region6: #{tpu_custom_call.1} parent=1 // loop_footer
      %s20 = sadd.s32 1, %s16
    $region7: #{tpu_custom_call.1} parent=1 // loop_footer_branch
      %15 = sbr.rel target = $region3
    $region8: #{tpu_custom_call.1} parent=1 // loop_exit
      _
    %883 = vsyncpa [#allocation3], 1
    %s884 = scalar_lea.sflag [#allocation3], 1
    %885 = vsyncpa %s884, 1
    %886 = vsyncpa [#allocation6], 1
    %887 = vsyncpa [#allocation4], 1
    %s888 = scalar_lea.sflag [#allocation4], 1
    %889 = vsyncpa %s888, 1

</llo_original>
